<compile_context>
chip_gen: v7x
topology: tpu7x:2x2x1
jax: 0.10.0
libtpu: 0.0.40
codegen_flags: <defaults>
</compile_context>

<pallas_src>
import jax
import jax.numpy as jnp
from jax.experimental import pallas as pl
from jax.experimental.pallas import tpu as pltpu

_TARGET_BLOCK_BYTES = 8 * 1024 * 1024   # ~8 MiB main block (v7x roofline; fine on v5e/v6e)
_VMEM_LIMIT_BYTES = 48 * 1024 * 1024    # 2 bufs x (in + out) 8 MiB blocks = 32 MiB < 48 MiB
_MIN_GRID_BLOCKS = 2                    # v7x has 2 TensorCores -> need >= 2 grid steps


def _normalize_kernel(x_ref, sb_ref, o_ref):
    # x_ref: (BR, BL) tile; sb_ref: (BR, 2) f32 with [:,0]=scale, [:,1]=bias.
    x = x_ref[...].astype(jnp.float32)
    sb = sb_ref[...]
    scale = sb[:, 0:1]                       # (BR, 1), broadcasts along lanes
    bias = sb[:, 1:2]
    o_ref[...] = (x * scale + bias).astype(o_ref.dtype)


def _round_up(v, m):
    return -(-v // m) * m


def _choose_tiles(rows, cols, itemsize,
                  target_bytes=_TARGET_BLOCK_BYTES,
                  min_blocks=_MIN_GRID_BLOCKS):
    """Pick a (BR, BL) block: BL a multiple of 128 (or full cols), BR a
    multiple of 8 (or full rows), ~target_bytes per block, and at least
    `min_blocks` total grid steps when the array is splittable (megacore)."""
    max_elems = max(128, target_bytes // itemsize)

    # Lane (last-dim) tile.
    if cols * min(rows, 8) <= max_elems:
        bl = cols                                       # full dim: always legal
    else:
        bl = max(128, (max_elems // max(min(rows, 8), 1)) // 128 * 128)
        bl = min(bl, cols)                              # full dim or multiple of 128

    # Sublane (second-to-last) tile.
    max_rows = max(1, max_elems // bl)
    if rows <= max_rows:
        br = rows                                       # full dim: always legal
    else:
        br = min(max(8, (max_rows // 8) * 8), rows)     # multiple of 8 or full dim

    # Grid-step floor: make sure both TensorCores get work on v7x.
    def n_blocks(br_, bl_):
        return pl.cdiv(rows, br_) * pl.cdiv(cols, bl_)

    if n_blocks(br, bl) < min_blocks:
        # Prefer splitting rows (keeps the output full lane width).
        if rows > 8:
            br_new = max(8, _round_up(pl.cdiv(rows, min_blocks), 8))
            if br_new < rows:
                br = br_new
        if n_blocks(br, bl) < min_blocks and cols > 128:
            bl_new = max(128, _round_up(pl.cdiv(cols, min_blocks), 128))
            if bl_new < cols:
                bl = bl_new
    return br, bl


def _normalize_impl(x, mean, std):
    """(x - mean[None, :, None, None]) / std[None, :, None, None]."""
    N, C, H, W = x.shape

    # C-length precompute (float32): out = x * scale + bias.
    scale_c = 1.0 / std.astype(jnp.float32)             # (C,)
    bias_c = -mean.astype(jnp.float32) * scale_c        # (C,)

    rows, cols = N * C, H * W

    # Lane-density guard: tiny spatial dims -> masked narrow stores in Pallas;
    # let XLA fuse the trivial elementwise op instead.
    if cols < 128:
        out = (x.astype(jnp.float32) * scale_c[None, :, None, None]
               + bias_c[None, :, None, None]).astype(x.dtype)
        return out

    x2 = x.reshape(rows, cols)                           # free for NCHW layout
    # Packed (rows, 2) f32 sideband: [:, 0] = scale, [:, 1] = bias.
    sb = jnp.tile(jnp.stack([scale_c, bias_c], axis=-1), (N, 1))

    br, bl = _choose_tiles(rows, cols, x.dtype.itemsize)
    grid = (pl.cdiv(rows, br), pl.cdiv(cols, bl))        # cols axis innermost

    out2 = pl.pallas_call(
        _normalize_kernel,
        out_shape=jax.ShapeDtypeStruct((rows, cols), x.dtype),
        grid_spec=pl.GridSpec(
            grid=grid,
            in_specs=[
                pl.BlockSpec((br, bl), lambda i, j: (i, j)),
                pl.BlockSpec((br, 2), lambda i, j: (i, 0)),   # reused across j
            ],
            out_specs=pl.BlockSpec((br, bl), lambda i, j: (i, j)),
        ),
        compiler_params=pltpu.CompilerParams(
            dimension_semantics=("parallel", "parallel"),
            vmem_limit_bytes=_VMEM_LIMIT_BYTES,
        ),
        cost_estimate=pl.CostEstimate(
            flops=2 * rows * cols,
            transcendentals=0,
            bytes_accessed=2 * rows * cols * x.dtype.itemsize,
        ),
    )(x2, sb)

    return out2.reshape(N, C, H, W)


# One dispatch: scale/bias precompute, tile, reshapes and the pallas_call fuse.
normalize = jax.jit(_normalize_impl)


class Normalizer:
    """Mirror of the PyTorch Normalizer module (buffers mean/std, NCHW input)."""

    def __init__(self, mean, std):
        self.mean = jnp.asarray(mean)
        self.std = jnp.asarray(std)

    def __call__(self, tensor):
        return normalize(tensor, self.mean, self.std)


if __name__ == "__main__":
    key = jax.random.PRNGKey(0)
    kx, km, ks = jax.random.split(key, 3)

    N, C, H, W = 2, 4, 16, 16
    x = jax.random.normal(kx, (N, C, H, W), dtype=jnp.float32)

    # Deterministic "buffers" (as registered in Normalizer.__init__).
    mean = jax.random.normal(km, (C,), dtype=jnp.float32) * 0.1 + 0.5
    std = jax.random.uniform(ks, (C,), dtype=jnp.float32, minval=0.2, maxval=0.3)

    model = Normalizer(mean, std)
    out = model(x)
    out = jax.block_until_ready(out)

    # Pure-JAX reference of normalize_fn (NCHW, channel broadcast on dim 1).
    ref = (x - mean[None, :, None, None]) / std[None, :, None, None]

    assert out.shape == x.shape and out.dtype == x.dtype
    assert jnp.allclose(out, ref, atol=1e-5, rtol=1e-5)
    print("KERNEL_OK")
</pallas_src>

<mosaic_0001>
module attributes {stable_mosaic.version = 11 : i64} {
  func.func @_normalize_kernel(%arg0: i32, %arg1: i32, %arg2: memref<8x128xf32, #tpu.memory_space<vmem>>, %arg3: memref<8x2xf32, #tpu.memory_space<vmem>>, %arg4: memref<8x128xf32, #tpu.memory_space<vmem>>) attributes {dimension_semantics = [#tpu.dimension_semantics<parallel>, #tpu.dimension_semantics<parallel>], iteration_bounds = array<i64: 1, 2>, scalar_prefetch = 0 : i64, scratch_operands = 0 : i64, tpu.core_type = #tpu.core_type<tc>, window_params = [{transform_indices = @transform_0, window_bounds = array<i64: 8, 128>}, {transform_indices = @transform_1, window_bounds = array<i64: 8, 2>}, {transform_indices = @transform_2, window_bounds = array<i64: 8, 128>}]} {
    %c0 = arith.constant 0 : index
    %c0_0 = arith.constant 0 : index
    %0 = vector.load %arg2[%c0, %c0_0] : memref<8x128xf32, #tpu.memory_space<vmem>>, vector<8x128xf32>
    %c0_1 = arith.constant 0 : index
    %c0_2 = arith.constant 0 : index
    %1 = vector.load %arg3[%c0_1, %c0_2] : memref<8x2xf32, #tpu.memory_space<vmem>>, vector<8x2xf32>
    %2 = vector.extract_strided_slice %1 {offsets = [0, 0], sizes = [8, 1], strides = [1, 1]} : vector<8x2xf32> to vector<8x1xf32>
    %3 = vector.extract_strided_slice %1 {offsets = [0, 1], sizes = [8, 1], strides = [1, 1]} : vector<8x2xf32> to vector<8x1xf32>
    %4 = vector.broadcast %2 : vector<8x1xf32> to vector<8x128xf32>
    %5 = arith.mulf %0, %4 : vector<8x128xf32>
    %6 = vector.broadcast %3 : vector<8x1xf32> to vector<8x128xf32>
    %7 = arith.addf %5, %6 : vector<8x128xf32>
    %c0_3 = arith.constant 0 : index
    %c0_4 = arith.constant 0 : index
    %8 = vector.load %arg4[%c0_3, %c0_4] : memref<8x128xf32, #tpu.memory_space<vmem>>, vector<8x128xf32>
    tpu.vector_store %arg4[%c0_3, %c0_4], %7 {strides = array<i32>} : memref<8x128xf32, #tpu.memory_space<vmem>>, vector<8x128xf32>,
    return
  }
  func.func @transform_0(%arg0: i32, %arg1: i32) -> (i32, i32) {
    %c0_i32 = arith.constant 0 : i32
    return %arg0, %arg1 : i32, i32
  }
  func.func @transform_1(%arg0: i32, %arg1: i32) -> (i32, i32) {
    %c0_i32 = arith.constant 0 : i32
    %c0_i32_0 = arith.constant 0 : i32
    return %arg0, %c0_i32 : i32, i32
  }
  func.func @transform_2(%arg0: i32, %arg1: i32) -> (i32, i32) {
    %c0_i32 = arith.constant 0 : i32
    return %arg0, %arg1 : i32, i32
  }
}

</mosaic_0001>

<llo_original>
// kernel: _normalize_impl.1
$region0: #{_normalize_impl.1}
  #allocation0 [shape = 'u32[]', space=smem, size = 0x4, offset = 0x4, fixed_abs, tag = 'smem constant byte address 0x4 - core index']
  #allocation1 [shape = 'u32[144,128]{1,0:T(1,128)}', space=vmem, size = 0x12000, scoped, tag = 'internal scratch']
  %s0 = inlined_call_operand.vmem [shape: f32[8,256], index: 0, kind: input, shape index: {}]
  %s1 = inlined_call_operand.vmem [shape: f32[8,2], index: 1, kind: input, shape index: {}]
  %s2 = inlined_call_operand.vmem [shape: f32[8,256], index: 2, kind: output, shape index: {}]
  %s3 = sld [smem:[#allocation0]]
  $region41: #{_normalize_impl.1} parent=0
    _
  %s5 = ssub.s32 1, %s3
  %s6 = scalar_select 0, %s5, %s3
  loop: start=0, step=1, limit=4
  $region2: #{_normalize_impl.1} parent=0 // loop_pre_header
    _
  $region3: #{_normalize_impl.1} parent=0 // loop_header
    %s8 = sphi 0, %s12
    %p9 = scmp.ge.s32.totalorder %s8, 4
    %s15 = sphi 0, %s27
    %s16 = sphi 0, %s23
    %s17 = sphi 0, %s15
    %s18 = sphi 0, %s16
    %s19 = sphi 0, %s17
    %s20 = sphi 0, %s18
    %s32 = sphi 0, %s34
    %s35 = sphi 0, %s32
    %s36 = sphi 0, %s35
    %s52 = sphi 0, %s36
    %s58 = sphi 0, %s60
    %s61 = sphi 0, %s58
    %s62 = sphi 0, %s61
    %s78 = sphi 0, %s62
    %s86 = sphi 0, %s88
    %s89 = sphi 0, %s86
    %s90 = sphi 0, %s89
    %s106 = sphi 0, %s90
  $region4: #{_normalize_impl.1} parent=0 // loop_header_branch
    %11 = sbr.rel (%p9) target = $region8
  $region5: #{_normalize_impl.1} parent=0 // loop_body
    %s13 = ssub.s32 %s8, 1
    %s14 = ssub.s32 %s8, 2
    %s21 = sadd.s32 1, %s16
    %p22 = scmp.ge.s32.totalorder %s21, 2
    %s23 = scalar_select %p22, 0, %s21
    %s24 = sadd.s32 1, %s15
    %s25 = scalar_select %p22, %s24, %s15
    %p26 = scmp.ge.s32.totalorder %s25, 1
    %s27 = scalar_select %p26, 0, %s25
    %s28 = ssub.s32 %s15, %s27
    %s29 = ssub.s32 %s16, %s23
    %s30 = sor.u32 %s28, %s29
    %p31 = scmp.eq.s32.totalorder %s30, 0
    %s33 = sadd.s32 %s32, 1
    %s34 = scalar_select %p31, %s32, %s33
    %p37 = pneg %p31
    %p38 = scmp.eq.s32.totalorder %s8, 1
    %p39 = por %p37, %p38
    %p40 = scmp.ne.s32.totalorder %s32, %s35
    %p41 = scmp.eq.s32.totalorder %s8, 0
    %p42 = por %p40, %p41
    %p43 = scmp.ne.s32.totalorder %s32, %s35
    %p44 = scmp.eq.s32.totalorder %s13, 1
    %p45 = por %p43, %p44
    %p46 = scmp.ne.s32.totalorder %s35, %s36
    %p47 = scmp.eq.s32.totalorder %s13, 0
    %p48 = por %p46, %p47
    %p49 = scmp.ne.s32.totalorder %s35, %s36
    %p50 = scmp.eq.s32.totalorder %s14, 1
    %p51 = por %p49, %p50
    %p53 = scmp.ne.s32.totalorder %s36, %s52
    %p54 = scmp.eq.s32.totalorder %s14, 0
    %p55 = por %p53, %p54
    %s56 = ssub.s32 %s15, %s27
    %p57 = scmp.eq.s32.totalorder %s56, 0
    %s59 = sadd.s32 %s58, 1
    %s60 = scalar_select %p57, %s58, %s59
    %p63 = pneg %p57
    %p64 = scmp.eq.s32.totalorder %s8, 1
    %p65 = por %p63, %p64
    %p66 = scmp.ne.s32.totalorder %s58, %s61
    %p67 = scmp.eq.s32.totalorder %s8, 0
    %p68 = por %p66, %p67
    %p69 = scmp.ne.s32.totalorder %s58, %s61
    %p70 = scmp.eq.s32.totalorder %s13, 1
    %p71 = por %p69, %p70
    %p72 = scmp.ne.s32.totalorder %s61, %s62
    %p73 = scmp.eq.s32.totalorder %s13, 0
    %p74 = por %p72, %p73
    %p75 = scmp.ne.s32.totalorder %s61, %s62
    %p76 = scmp.eq.s32.totalorder %s14, 1
    %p77 = por %p75, %p76
    %p79 = scmp.ne.s32.totalorder %s62, %s78
    %p80 = scmp.eq.s32.totalorder %s14, 0
    %p81 = por %p79, %p80
    %s82 = ssub.s32 %s15, %s27
    %s83 = ssub.s32 %s16, %s23
    %s84 = sor.u32 %s82, %s83
    %p85 = scmp.eq.s32.totalorder %s84, 0
    %s87 = sadd.s32 %s86, 1
    %s88 = scalar_select %p85, %s86, %s87
    %p91 = pneg %p85
    %p92 = scmp.eq.s32.totalorder %s8, 1
    %p93 = por %p91, %p92
    %p94 = scmp.ne.s32.totalorder %s86, %s89
    %p95 = scmp.eq.s32.totalorder %s8, 0
    %p96 = por %p94, %p95
    %p97 = scmp.ne.s32.totalorder %s86, %s89
    %p98 = scmp.eq.s32.totalorder %s13, 1
    %p99 = por %p97, %p98
    %p100 = scmp.ne.s32.totalorder %s89, %s90
    %p101 = scmp.eq.s32.totalorder %s13, 0
    %p102 = por %p100, %p101
    %p103 = scmp.ne.s32.totalorder %s89, %s90
    %p104 = scmp.eq.s32.totalorder %s14, 1
    %p105 = por %p103, %p104
    %p107 = scmp.ne.s32.totalorder %s90, %s106
    %p108 = scmp.eq.s32.totalorder %s14, 0
    %p109 = por %p107, %p108
    %p110 = scmp.le.s32.totalorder 1, %s8
    %p111 = scmp.lt.s32.totalorder %s8, 3
    %p112 = pnand %p110, %p111
    %p113 = pneg %p112
    // Predicated region
    $region9: #{_normalize_impl.1} parent=5 // pred_check
      _
    $region10: #{_normalize_impl.1} parent=5 // pred_check_branch
      %115 = sbr.rel (%p112) target = $region12
    $region11: #{_normalize_impl.1} parent=5 // pred_region
      %s116 = ssub.s32 %s8, 1
      // Predicated region
      $region13: #{_normalize_impl.1} parent=11 // pred_check
        %p117 = pneg %p74
      $region14: #{_normalize_impl.1} parent=11 // pred_check_branch
        %119 = sbr.rel (%p117) target = $region16
      $region15: #{_normalize_impl.1} parent=11 // pred_region
        %p120 = scmp.lt.s32.totalorder %s17, 0
        %s121 = scalar_select %p120, %s17, 0
        %s122 = smul.addr %s121, 8
        %s123 = scalar_lea.vmem %s1, %s122
      $region16: #{_normalize_impl.1} parent=11 // pred_fallthru
        _
    $region12: #{_normalize_impl.1} parent=5 // pred_fallthru
      _
    %p124 = scmp.lt.s32.totalorder %s8, 2
    // Predicated region
    $region17: #{_normalize_impl.1} parent=5 // pred_check
      %p125 = pneg %p124
    $region18: #{_normalize_impl.1} parent=5 // pred_check_branch
      %127 = sbr.rel (%p125) target = $region20
    $region19: #{_normalize_impl.1} parent=5 // pred_region
      // Predicated region
      $region21: #{_normalize_impl.1} parent=19 // pred_check
        %p128 = pneg %p42
      $region22: #{_normalize_impl.1} parent=19 // pred_check_branch
        %130 = sbr.rel (%p128) target = $region24
      $region23: #{_normalize_impl.1} parent=19 // pred_region
        %p131 = scmp.lt.s32.totalorder %s15, 0
        %s132 = scalar_select %p131, %s15, 0
        %p133 = scmp.lt.s32.totalorder %s16, 1
        %s134 = scalar_select %p133, %s16, 1
        %s135 = smul.addr %s132, 2
        %s136 = sadd.s32 %s134, %s135
        %s137 = smul.addr %s136, 8
        %s138 = scalar_lea.vmem %s0, %s137
      $region24: #{_normalize_impl.1} parent=19 // pred_fallthru
        _
    $region20: #{_normalize_impl.1} parent=5 // pred_fallthru
      _
    %p139 = scmp.le.s32.totalorder 1, %s8
    %p140 = scmp.lt.s32.totalorder %s8, 3
    %p141 = pnand %p139, %p140
    %p142 = pneg %p141
    // Predicated region
    $region25: #{_normalize_impl.1} parent=5 // pred_check
      _
    $region26: #{_normalize_impl.1} parent=5 // pred_check_branch
      %144 = sbr.rel (%p141) target = $region28
    $region27: #{_normalize_impl.1} parent=5 // pred_region
      %s145 = ssub.s32 %s8, 1
      %p146 = scmp.lt.s32.totalorder %s17, 0
      %s147 = scalar_select %p146, %s17, 0
      %p148 = scmp.lt.s32.totalorder %s18, 1
      %s149 = scalar_select %p148, %s18, 1
      %s150 = smul.addr %s147, 2
      %s151 = sadd.s32 %s149, %s150
      %s152 = smul.addr %s151, 8
      %s153 = scalar_lea.vmem %s0, %s152
      %p154 = pneg %p48
      %p155 = pneg %p45
      %p156 = scmp.lt.s32.totalorder %s17, 0
      %s157 = scalar_select %p156, %s17, 0
      %s158 = smul.addr %s157, 8
      %s159 = scalar_lea.vmem %s1, %s158
      %p160 = pneg %p74
      %p161 = pneg %p71
      %p162 = pneg %p102
      %p163 = pneg %p99
      %p164 = scmp.lt.s32.totalorder %s17, 0
      %s165 = scalar_select %p164, %s17, 0
      %p166 = scmp.lt.s32.totalorder %s18, 1
      %s167 = scalar_select %p166, %s18, 1
      %s168 = smul.addr %s165, 2
      %s169 = sadd.s32 %s167, %s168
      %s170 = smul.addr %s169, 8
      %s171 = scalar_lea.vmem %s2, %s170
      %p172 = scmp.lt.s32.totalorder %s17, 0
      %s173 = scalar_select %p172, %s17, 0
      %p174 = scmp.lt.s32.totalorder %s18, 1
      %s175 = scalar_select %p174, %s18, 1
      %s176 = smul.addr %s173, 2
      %s177 = sadd.s32 %s175, %s176
      %s178 = smul.addr %s177, 8
      %s179 = scalar_lea.vmem %s0, %s178
      %p180 = scmp.lt.s32.totalorder %s17, 0
      %s181 = scalar_select %p180, %s17, 0
      %s182 = smul.addr %s181, 8
      %s183 = scalar_lea.vmem %s1, %s182
      %p184 = scmp.lt.s32.totalorder %s17, 0
      %s185 = scalar_select %p184, %s17, 0
      %p186 = scmp.lt.s32.totalorder %s18, 1
      %s187 = scalar_select %p186, %s18, 1
      %s188 = smul.addr %s185, 2
      %s189 = sadd.s32 %s187, %s188
      %s190 = smul.addr %s189, 8
      %s191 = scalar_lea.vmem %s2, %s190
      %v192 = vld [vmem:[%s179] sm:$0xff]
      %v193 = vld [vmem:[%s183] sm:$0xff]
      %195 = vset.pattern.permute.xlu0 0
      %196 = vperm.xlu0 %195, %v193
      %v197 = vpop.permute.xlu0 %196
      %v199 = vmul.f32 %v192, %v197
      %200 = vset.pattern.permute.xlu0 1
      %201 = vperm.xlu0 %200, %v193
      %v202 = vpop.permute.xlu0 %201
      %v204 = vadd.f32 %v199, %v202
      %205 = vst [vmem:[%s191] sm:$0xff] %v204
      %p206 = scmp.lt.s32.totalorder %s17, 0
      %s207 = scalar_select %p206, %s17, 0
      %p208 = scmp.lt.s32.totalorder %s18, 1
      %s209 = scalar_select %p208, %s18, 1
      %s210 = smul.addr %s207, 2
      %s211 = sadd.s32 %s209, %s210
      %s212 = smul.addr %s211, 8
      %s213 = scalar_lea.vmem %s2, %s212
      // Predicated region
      $region29: #{_normalize_impl.1} parent=27 // pred_check
        %p214 = pneg %p99
      $region30: #{_normalize_impl.1} parent=27 // pred_check_branch
        %216 = sbr.rel (%p214) target = $region32
      $region31: #{_normalize_impl.1} parent=27 // pred_region
        _
      $region32: #{_normalize_impl.1} parent=27 // pred_fallthru
        _
    $region28: #{_normalize_impl.1} parent=5 // pred_fallthru
      _
    %p217 = scmp.le.s32.totalorder 2, %s8
    // Predicated region
    $region33: #{_normalize_impl.1} parent=5 // pred_check
      %p218 = pneg %p217
    $region34: #{_normalize_impl.1} parent=5 // pred_check_branch
      %220 = sbr.rel (%p218) target = $region36
    $region35: #{_normalize_impl.1} parent=5 // pred_region
      %s221 = ssub.s32 %s8, 2
      // Predicated region
      $region37: #{_normalize_impl.1} parent=35 // pred_check
        %p222 = pneg %p105
      $region38: #{_normalize_impl.1} parent=35 // pred_check_branch
        %224 = sbr.rel (%p222) target = $region40
      $region39: #{_normalize_impl.1} parent=35 // pred_region
        %p225 = scmp.lt.s32.totalorder %s19, 0
        %s226 = scalar_select %p225, %s19, 0
        %p227 = scmp.lt.s32.totalorder %s20, 1
        %s228 = scalar_select %p227, %s20, 1
        %s229 = smul.addr %s226, 2
        %s230 = sadd.s32 %s228, %s229
        %s231 = smul.addr %s230, 8
        %s232 = scalar_lea.vmem %s2, %s231
      $region40: #{_normalize_impl.1} parent=35 // pred_fallthru
        _
    $region36: #{_normalize_impl.1} parent=5 // pred_fallthru
      _
  $region6: #{_normalize_impl.1} parent=0 // loop_footer
    %s12 = sadd.s32 1, %s8
  $region7: #{_normalize_impl.1} parent=0 // loop_footer_branch
    %7 = sbr.rel target = $region3
  $region8: #{_normalize_impl.1} parent=0 // loop_exit
    _

</llo_original>
